<compile_context>
chip_gen: v5e
topology: v5e:2x2
jax: 0.10.0
libtpu: 0.0.40
codegen_flags: <defaults>
</compile_context>

<pallas_src>
import functools

import jax
import jax.numpy as jnp
from jax.experimental import pallas as pl
from jax.experimental.pallas import tpu as pltpu

F_IN, H1, H2, F_OUT = 11, 32, 16, 1
BN_EPS = 1e-5


def _mlp_kernel(
    xT_ref,            # (F_IN, TN)   batch on lanes
    w1t_ref, b1_ref,   # (H1, F_IN), (H1, 1)   BN1 already folded in
    w2t_ref, b2_ref,   # (H2, H1),   (H2, 1)   BN2 already folded in
    w3t_ref, b3_ref,   # (F_OUT, H2),(F_OUT,1) BN3 already folded in
    o_ref,             # (F_OUT, TN)
):
    x = xT_ref[...].astype(jnp.float32)                                   # (F_IN, TN)

    h = jnp.dot(w1t_ref[...], x, preferred_element_type=jnp.float32)      # (H1, TN)
    h = jnp.maximum(h + b1_ref[...], 0.0)

    h = jnp.dot(w2t_ref[...], h, preferred_element_type=jnp.float32)      # (H2, TN)
    h = jnp.maximum(h + b2_ref[...], 0.0)

    y = jnp.dot(w3t_ref[...], h, preferred_element_type=jnp.float32)      # (F_OUT, TN)
    o_ref[...] = jax.nn.sigmoid(y + b3_ref[...]).astype(o_ref.dtype)


def _bn_scale_shift(gamma, beta, mean, var, eps=BN_EPS):
    """BatchNorm1d (eval) as per-feature scale/shift: y = x*s + t."""
    s = gamma / jnp.sqrt(var + eps)
    t = beta - mean * s
    return s, t


def _fold_bn_into_linear(bn_params, w, b):
    """(x*s + t) @ W + b  ==  x @ (diag(s)@W) + (t@W + b)."""
    s, t = _bn_scale_shift(*bn_params)
    w_f = s[:, None] * w           # (in, out)
    b_f = t @ w + b                # (out,)
    return w_f, b_f


def _round_up(a, b):
    return (a + b - 1) // b * b


@functools.partial(jax.jit, static_argnames=("tile_n",))
def neural_network_forward(x, params, tile_n=2048):
    """x: (N, 11).  Returns (N, 1) sigmoid probabilities (eval-mode module)."""
    N = x.shape[0]

    # ---- Host-side parameter prep: fold the three BatchNorms into the
    # ---- subsequent Linear layers, transpose for the batch-on-lanes layout.
    w1f, b1f = _fold_bn_into_linear(params["bn1"], *params["layer1"])
    w2f, b2f = _fold_bn_into_linear(params["bn2"], *params["layer2"])
    w3f, b3f = _fold_bn_into_linear(params["bn3"], *params["output"])
    w1t, b1c = w1f.T, b1f[:, None]        # (H1, F_IN), (H1, 1)
    w2t, b2c = w2f.T, b2f[:, None]        # (H2, H1),   (H2, 1)
    w3t, b3c = w3f.T, b3f[:, None]        # (F_OUT, H2),(F_OUT, 1)

    # ---- Batch on the lane axis; pad N up to a multiple of the lane tile.
    # (Ideally the producer already stores x as (F_IN, N) / bf16; the
    #  transpose here is a cheap single pass over the 11-feature input.)
    tile_n = _round_up(max(int(tile_n), 128), 128)
    tile = min(tile_n, _round_up(N, 128))
    n_pad = _round_up(N, tile)
    xT = x.T                                                   # (F_IN, N)
    if n_pad != N:
        xT = jnp.pad(xT, ((0, 0), (0, n_pad - N)))

    grid = (n_pad // tile,)
    const = lambda shape: pl.BlockSpec(shape, lambda i: (0, 0))
    # NOTE: the parameter blocks total ~4.5 KiB, so default double-buffering
    # of these constant-index inputs is negligible; not worth pipeline tweaks.

    out_t = pl.pallas_call(
        _mlp_kernel,
        out_shape=jax.ShapeDtypeStruct((F_OUT, n_pad), x.dtype),
        grid_spec=pltpu.PrefetchScalarGridSpec(
            num_scalar_prefetch=0,
            grid=grid,
            in_specs=[
                pl.BlockSpec((F_IN, tile), lambda i: (0, i)),
                const((H1, F_IN)), const((H1, 1)),
                const((H2, H1)), const((H2, 1)),
                const((F_OUT, H2)), const((F_OUT, 1)),
            ],
            out_specs=pl.BlockSpec((F_OUT, tile), lambda i: (0, i)),
        ),
        compiler_params=pltpu.CompilerParams(
            dimension_semantics=("parallel",),
        ),
    )(xT, w1t, b1c, w2t, b2c, w3t, b3c)

    return out_t[:, :N].T                                      # (N, F_OUT)


def _init_params(key):
    """Deterministic synthetic parameters matching the PyTorch module shapes."""
    ks = jax.random.split(key, 18)

    def linear(kw, kb, fan_in, fan_out):
        bound = 1.0 / jnp.sqrt(fan_in)
        w = jax.random.uniform(kw, (fan_in, fan_out), jnp.float32, -bound, bound)
        b = jax.random.uniform(kb, (fan_out,), jnp.float32, -bound, bound)
        return w, b

    def bn(kg, kb, km, kv, f):
        gamma = 1.0 + 0.1 * jax.random.normal(kg, (f,), jnp.float32)
        beta = 0.1 * jax.random.normal(kb, (f,), jnp.float32)
        mean = 0.1 * jax.random.normal(km, (f,), jnp.float32)
        var = jnp.abs(1.0 + 0.1 * jax.random.normal(kv, (f,), jnp.float32))
        return gamma, beta, mean, var

    return {
        "bn1": bn(ks[0], ks[1], ks[2], ks[3], F_IN),
        "layer1": linear(ks[4], ks[5], F_IN, H1),
        "bn2": bn(ks[6], ks[7], ks[8], ks[9], H1),
        "layer2": linear(ks[10], ks[11], H1, H2),
        "bn3": bn(ks[12], ks[13], ks[14], ks[15], H2),
        "output": linear(ks[16], ks[17], H2, F_OUT),
    }


def _reference_forward(x, params):
    """Plain-JAX reference (un-folded BN, eval semantics) for a sanity check."""
    def bn(h, p):
        g, b, m, v = p
        return (h - m) / jnp.sqrt(v + BN_EPS) * g + b

    h = bn(x, params["bn1"])
    h = jnp.maximum(h @ params["layer1"][0] + params["layer1"][1], 0.0)
    h = bn(h, params["bn2"])                       # dropout1: identity (eval)
    h = jnp.maximum(h @ params["layer2"][0] + params["layer2"][1], 0.0)
    h = bn(h, params["bn3"])                       # dropout2: identity (eval)
    y = h @ params["output"][0] + params["output"][1]
    return jax.nn.sigmoid(y)


if __name__ == "__main__":
    key = jax.random.PRNGKey(0)
    k_x, k_p = jax.random.split(key)

    N = 256  # small demo batch; tile_n=128 -> grid=(2,) so both v7x TCs get work
    x = jax.random.normal(k_x, (N, F_IN), jnp.float32)
    params = _init_params(k_p)

    out = neural_network_forward(x, params, tile_n=128)
    out = jax.block_until_ready(out)

    ref = _reference_forward(x, params)
    assert out.shape == (N, F_OUT)
    assert jnp.allclose(out, ref, atol=1e-5, rtol=1e-5)

    print("KERNEL_OK")
</pallas_src>

<mosaic_0001>
module attributes {stable_mosaic.version = 11 : i64} {
  func.func @_mlp_kernel(%arg0: i32, %arg1: memref<11x128xf32, #tpu.memory_space<vmem>>, %arg2: memref<32x11xf32, #tpu.memory_space<vmem>>, %arg3: memref<32x1xf32, #tpu.memory_space<vmem>>, %arg4: memref<16x32xf32, #tpu.memory_space<vmem>>, %arg5: memref<16x1xf32, #tpu.memory_space<vmem>>, %arg6: memref<1x16xf32, #tpu.memory_space<vmem>>, %arg7: memref<1x1xf32, #tpu.memory_space<vmem>>, %arg8: memref<1x128xf32, #tpu.memory_space<vmem>>) attributes {dimension_semantics = [#tpu.dimension_semantics<parallel>], iteration_bounds = array<i64: 2>, scalar_prefetch = 0 : i64, scratch_operands = 0 : i64, tpu.core_type = #tpu.core_type<tc>, window_params = [{transform_indices = @transform_0, window_bounds = array<i64: 11, 128>}, {pipeline_mode = #tpu.pipeline_mode<synchronous>, transform_indices = @transform_1, window_bounds = array<i64: 32, 11>}, {pipeline_mode = #tpu.pipeline_mode<synchronous>, transform_indices = @transform_2, window_bounds = array<i64: 32, 1>}, {pipeline_mode = #tpu.pipeline_mode<synchronous>, transform_indices = @transform_3, window_bounds = array<i64: 16, 32>}, {pipeline_mode = #tpu.pipeline_mode<synchronous>, transform_indices = @transform_4, window_bounds = array<i64: 16, 1>}, {pipeline_mode = #tpu.pipeline_mode<synchronous>, transform_indices = @transform_5, window_bounds = array<i64: 1, 16>}, {pipeline_mode = #tpu.pipeline_mode<synchronous>, transform_indices = @transform_6, window_bounds = array<i64: 1, 1>}, {transform_indices = @transform_7, window_bounds = array<i64: 1, 128>}]} {
    %c0 = arith.constant 0 : index
    %c0_0 = arith.constant 0 : index
    %0 = vector.load %arg1[%c0, %c0_0] : memref<11x128xf32, #tpu.memory_space<vmem>>, vector<11x128xf32>
    %c0_1 = arith.constant 0 : index
    %c0_2 = arith.constant 0 : index
    %1 = vector.load %arg2[%c0_1, %c0_2] : memref<32x11xf32, #tpu.memory_space<vmem>>, vector<32x11xf32>
    %cst = arith.constant dense<0.000000e+00> : vector<32x128xf32>
    %2 = tpu.matmul %1, %0, %cst {dimension_numbers = #tpu.dot_dimension_numbers<[1], [0], [0], [1], [0, 0, 1, 1], [], []>} : vector<32x11xf32>, vector<11x128xf32>, vector<32x128xf32> -> vector<32x128xf32>
    %c0_3 = arith.constant 0 : index
    %c0_4 = arith.constant 0 : index
    %3 = vector.load %arg3[%c0_3, %c0_4] : memref<32x1xf32, #tpu.memory_space<vmem>>, vector<32x1xf32>
    %4 = vector.broadcast %3 : vector<32x1xf32> to vector<32x128xf32>
    %5 = arith.addf %2, %4 : vector<32x128xf32>
    %cst_5 = arith.constant 0.000000e+00 : f32
    %6 = vector.broadcast %cst_5 : f32 to vector<32x128xf32>
    %7 = arith.maximumf %5, %6 : vector<32x128xf32>
    %c0_6 = arith.constant 0 : index
    %c0_7 = arith.constant 0 : index
    %8 = vector.load %arg4[%c0_6, %c0_7] : memref<16x32xf32, #tpu.memory_space<vmem>>, vector<16x32xf32>
    %cst_8 = arith.constant dense<0.000000e+00> : vector<16x128xf32>
    %9 = tpu.matmul %8, %7, %cst_8 {dimension_numbers = #tpu.dot_dimension_numbers<[1], [0], [0], [1], [0, 0, 1, 1], [], []>} : vector<16x32xf32>, vector<32x128xf32>, vector<16x128xf32> -> vector<16x128xf32>
    %c0_9 = arith.constant 0 : index
    %c0_10 = arith.constant 0 : index
    %10 = vector.load %arg5[%c0_9, %c0_10] : memref<16x1xf32, #tpu.memory_space<vmem>>, vector<16x1xf32>
    %11 = vector.broadcast %10 : vector<16x1xf32> to vector<16x128xf32>
    %12 = arith.addf %9, %11 : vector<16x128xf32>
    %cst_11 = arith.constant 0.000000e+00 : f32
    %13 = vector.broadcast %cst_11 : f32 to vector<16x128xf32>
    %14 = arith.maximumf %12, %13 : vector<16x128xf32>
    %c0_12 = arith.constant 0 : index
    %c0_13 = arith.constant 0 : index
    %15 = vector.load %arg6[%c0_12, %c0_13] : memref<1x16xf32, #tpu.memory_space<vmem>>, vector<1x16xf32>
    %cst_14 = arith.constant dense<0.000000e+00> : vector<1x128xf32>
    %16 = tpu.matmul %15, %14, %cst_14 {dimension_numbers = #tpu.dot_dimension_numbers<[1], [0], [0], [1], [0, 0, 1, 1], [], []>} : vector<1x16xf32>, vector<16x128xf32>, vector<1x128xf32> -> vector<1x128xf32>
    %c0_15 = arith.constant 0 : index
    %c0_16 = arith.constant 0 : index
    %17 = vector.load %arg7[%c0_15, %c0_16] : memref<1x1xf32, #tpu.memory_space<vmem>>, vector<1x1xf32>
    %18 = vector.broadcast %17 : vector<1x1xf32> to vector<1x128xf32>
    %19 = arith.addf %16, %18 : vector<1x128xf32>
    %20 = arith.negf %19 : vector<1x128xf32>
    %21 = math.exp %20 : vector<1x128xf32>
    %cst_17 = arith.constant 1.000000e+00 : f32
    %22 = vector.broadcast %cst_17 : f32 to vector<1x128xf32>
    %23 = arith.addf %22, %21 : vector<1x128xf32>
    %24 = arith.divf %22, %23 : vector<1x128xf32>
    %c0_18 = arith.constant 0 : index
    %c0_19 = arith.constant 0 : index
    %25 = vector.load %arg8[%c0_18, %c0_19] : memref<1x128xf32, #tpu.memory_space<vmem>>, vector<1x128xf32>
    tpu.vector_store %arg8[%c0_18, %c0_19], %24 {strides = array<i32>} : memref<1x128xf32, #tpu.memory_space<vmem>>, vector<1x128xf32>,
    return
  }
  func.func @transform_0(%arg0: i32) -> (i32, i32) {
    %c0_i32 = arith.constant 0 : i32
    %c0_i32_0 = arith.constant 0 : i32
    return %c0_i32, %arg0 : i32, i32
  }
  func.func @transform_1(%arg0: i32) -> (i32, i32) {
    %c0_i32 = arith.constant 0 : i32
    %c0_i32_0 = arith.constant 0 : i32
    %c0_i32_1 = arith.constant 0 : i32
    return %c0_i32, %c0_i32_0 : i32, i32
  }
  func.func @transform_2(%arg0: i32) -> (i32, i32) {
    %c0_i32 = arith.constant 0 : i32
    %c0_i32_0 = arith.constant 0 : i32
    %c0_i32_1 = arith.constant 0 : i32
    return %c0_i32, %c0_i32_0 : i32, i32
  }
  func.func @transform_3(%arg0: i32) -> (i32, i32) {
    %c0_i32 = arith.constant 0 : i32
    %c0_i32_0 = arith.constant 0 : i32
    %c0_i32_1 = arith.constant 0 : i32
    return %c0_i32, %c0_i32_0 : i32, i32
  }
  func.func @transform_4(%arg0: i32) -> (i32, i32) {
    %c0_i32 = arith.constant 0 : i32
    %c0_i32_0 = arith.constant 0 : i32
    %c0_i32_1 = arith.constant 0 : i32
    return %c0_i32, %c0_i32_0 : i32, i32
  }
  func.func @transform_5(%arg0: i32) -> (i32, i32) {
    %c0_i32 = arith.constant 0 : i32
    %c0_i32_0 = arith.constant 0 : i32
    %c0_i32_1 = arith.constant 0 : i32
    return %c0_i32, %c0_i32_0 : i32, i32
  }
  func.func @transform_6(%arg0: i32) -> (i32, i32) {
    %c0_i32 = arith.constant 0 : i32
    %c0_i32_0 = arith.constant 0 : i32
    %c0_i32_1 = arith.constant 0 : i32
    return %c0_i32, %c0_i32_0 : i32, i32
  }
  func.func @transform_7(%arg0: i32) -> (i32, i32) {
    %c0_i32 = arith.constant 0 : i32
    %c0_i32_0 = arith.constant 0 : i32
    return %c0_i32, %arg0 : i32, i32
  }
}

</mosaic_0001>

<llo_original>
// kernel: neural_network_forward.1
$region0: #{neural_network_forward.1}
  #allocation0 [shape = 'u32[]', space=smem, size = 0x4, offset = 0x4, fixed_abs, tag = 'smem constant byte address 0x4 - core index']
  #allocation1 [shape = 'u32[72,128]{1,0:T(1,128)}', space=vmem, size = 0x9000, scoped, tag = 'internal scratch']
  #allocation2 [shape = 'f32[1,1]{1,0:T(1,128)S(1)}', space=vmem, size = 0x200, scoped, tag = 'scoped memory for neural_network_forward.1']
  %s0 = inlined_call_operand.vmem [shape: f32[11,256], index: 0, kind: input, shape index: {}]
  %s1 = inlined_call_operand.vmem [shape: f32[32,11], index: 1, kind: input, shape index: {}]
  %s2 = inlined_call_operand.vmem [shape: f32[32,1], index: 2, kind: input, shape index: {}]
  %s3 = inlined_call_operand.vmem [shape: f32[16,32], index: 3, kind: input, shape index: {}]
  %s4 = inlined_call_operand.vmem [shape: f32[16,1], index: 4, kind: input, shape index: {}]
  %s5 = inlined_call_operand.vmem [shape: f32[1,16], index: 5, kind: input, shape index: {}]
  %s6 = inlined_call_operand.<no memory space> [shape: f32[1,1], index: 6, kind: input, shape index: {}]
  %s7 = inlined_call_operand.hbm [shape: f32[1,256], index: 7, kind: output, shape index: {}]
  %s8 = sld [smem:[#allocation0]]
  $region99: #{neural_network_forward.1} parent=0
    _
  %s10 = ssub.s32 1, %s8
  %s11 = scalar_select 0, %s10, %s8
  %v12 = vstv %s6
  %13 = vst [vmem:[#allocation2] sm:$0x1] %v12
  $region1: #{neural_network_forward.1} parent=0
    #allocation3 [shape = 'u8[16384]{0}', space=vmem, size = 0x4000, scoped, tag = 'input window, operand 0']
    #allocation4 [shape = 'u8[1024]{0}', space=vmem, size = 0x400, scoped, tag = 'output window, operand 0']
    #allocation5 [shape = 's32[2]{0}', space=sflag, size = 0x8, scoped, tag = 'scoped memory for neural_network_forward.1']
    %14 = vsyncpa [#allocation5], 0
    %s15 = scalar_lea.sflag [#allocation5], 1
    %16 = vsyncpa %s15, 0
    loop: start=0, step=1, limit=4
    $region2: #{neural_network_forward.1} parent=1 // loop_pre_header
      _
    $region3: #{neural_network_forward.1} parent=1 // loop_header
      %s18 = sphi 0, %s22
      %p19 = scmp.ge.s32.totalorder %s18, 4
      %s28 = sphi 0, %s30
      %s31 = sphi 0, %s28
      %s32 = sphi 0, %s31
      %s48 = sphi 0, %s32
      %s52 = sphi 0, %s52
      %s54 = sphi 0, %s52
      %s55 = sphi 0, %s54
      %s69 = sphi 0, %s55
      %s73 = sphi 0, %s73
      %s75 = sphi 0, %s73
      %s76 = sphi 0, %s75
      %s90 = sphi 0, %s76
      %s94 = sphi 0, %s94
      %s96 = sphi 0, %s94
      %s97 = sphi 0, %s96
      %s111 = sphi 0, %s97
      %s115 = sphi 0, %s115
      %s117 = sphi 0, %s115
      %s118 = sphi 0, %s117
      %s132 = sphi 0, %s118
      %s136 = sphi 0, %s136
      %s138 = sphi 0, %s136
      %s139 = sphi 0, %s138
      %s153 = sphi 0, %s139
      %s157 = sphi 0, %s157
      %s159 = sphi 0, %s157
      %s160 = sphi 0, %s159
      %s174 = sphi 0, %s160
      %s180 = sphi 0, %s182
      %s183 = sphi 0, %s180
      %s184 = sphi 0, %s183
      %s200 = sphi 0, %s184
    $region4: #{neural_network_forward.1} parent=1 // loop_header_branch
      %21 = sbr.rel (%p19) target = $region8
    $region5: #{neural_network_forward.1} parent=1 // loop_body
      %s23 = ssub.s32 %s18, 1
      %s24 = ssub.s32 %s18, 2
      %s25 = sadd.s32 %s18, 1
      %s26 = ssub.s32 %s18, %s25
      %p27 = scmp.eq.s32.totalorder %s26, 0
      %s29 = sadd.s32 %s28, 1
      %s30 = scalar_select %p27, %s28, %s29
      %p33 = pneg %p27
      %p34 = scmp.eq.s32.totalorder %s18, 1
      %p35 = por %p33, %p34
      %p36 = scmp.ne.s32.totalorder %s28, %s31
      %p37 = scmp.eq.s32.totalorder %s18, 0
      %p38 = por %p36, %p37
      %p39 = scmp.ne.s32.totalorder %s28, %s31
      %p40 = scmp.eq.s32.totalorder %s23, 1
      %p41 = por %p39, %p40
      %p42 = scmp.ne.s32.totalorder %s31, %s32
      %p43 = scmp.eq.s32.totalorder %s23, 0
      %p44 = por %p42, %p43
      %p45 = scmp.ne.s32.totalorder %s31, %s32
      %p46 = scmp.eq.s32.totalorder %s24, 1
      %p47 = por %p45, %p46
      %p49 = scmp.ne.s32.totalorder %s32, %s48
      %p50 = scmp.eq.s32.totalorder %s24, 0
      %p51 = por %p49, %p50
      %s53 = sadd.s32 %s52, 1
      %p56 = scmp.eq.s32.totalorder %s18, 1
      %p57 = scmp.ne.s32.totalorder %s52, %s54
      %p58 = scmp.eq.s32.totalorder %s18, 0
      %p59 = por %p57, %p58
      %p60 = scmp.ne.s32.totalorder %s52, %s54
      %p61 = scmp.eq.s32.totalorder %s23, 1
      %p62 = por %p60, %p61
      %p63 = scmp.ne.s32.totalorder %s54, %s55
      %p64 = scmp.eq.s32.totalorder %s23, 0
      %p65 = por %p63, %p64
      %p66 = scmp.ne.s32.totalorder %s54, %s55
      %p67 = scmp.eq.s32.totalorder %s24, 1
      %p68 = por %p66, %p67
      %p70 = scmp.ne.s32.totalorder %s55, %s69
      %p71 = scmp.eq.s32.totalorder %s24, 0
      %p72 = por %p70, %p71
      %s74 = sadd.s32 %s73, 1
      %p77 = scmp.eq.s32.totalorder %s18, 1
      %p78 = scmp.ne.s32.totalorder %s73, %s75
      %p79 = scmp.eq.s32.totalorder %s18, 0
      %p80 = por %p78, %p79
      %p81 = scmp.ne.s32.totalorder %s73, %s75
      %p82 = scmp.eq.s32.totalorder %s23, 1
      %p83 = por %p81, %p82
      %p84 = scmp.ne.s32.totalorder %s75, %s76
      %p85 = scmp.eq.s32.totalorder %s23, 0
      %p86 = por %p84, %p85
      %p87 = scmp.ne.s32.totalorder %s75, %s76
      %p88 = scmp.eq.s32.totalorder %s24, 1
      %p89 = por %p87, %p88
      %p91 = scmp.ne.s32.totalorder %s76, %s90
      %p92 = scmp.eq.s32.totalorder %s24, 0
      %p93 = por %p91, %p92
      %s95 = sadd.s32 %s94, 1
      %p98 = scmp.eq.s32.totalorder %s18, 1
      %p99 = scmp.ne.s32.totalorder %s94, %s96
      %p100 = scmp.eq.s32.totalorder %s18, 0
      %p101 = por %p99, %p100
      %p102 = scmp.ne.s32.totalorder %s94, %s96
      %p103 = scmp.eq.s32.totalorder %s23, 1
      %p104 = por %p102, %p103
      %p105 = scmp.ne.s32.totalorder %s96, %s97
      %p106 = scmp.eq.s32.totalorder %s23, 0
      %p107 = por %p105, %p106
      %p108 = scmp.ne.s32.totalorder %s96, %s97
      %p109 = scmp.eq.s32.totalorder %s24, 1
      %p110 = por %p108, %p109
      %p112 = scmp.ne.s32.totalorder %s97, %s111
      %p113 = scmp.eq.s32.totalorder %s24, 0
      %p114 = por %p112, %p113
      %s116 = sadd.s32 %s115, 1
      %p119 = scmp.eq.s32.totalorder %s18, 1
      %p120 = scmp.ne.s32.totalorder %s115, %s117
      %p121 = scmp.eq.s32.totalorder %s18, 0
      %p122 = por %p120, %p121
      %p123 = scmp.ne.s32.totalorder %s115, %s117
      %p124 = scmp.eq.s32.totalorder %s23, 1
      %p125 = por %p123, %p124
      %p126 = scmp.ne.s32.totalorder %s117, %s118
      %p127 = scmp.eq.s32.totalorder %s23, 0
      %p128 = por %p126, %p127
      %p129 = scmp.ne.s32.totalorder %s117, %s118
      %p130 = scmp.eq.s32.totalorder %s24, 1
      %p131 = por %p129, %p130
      %p133 = scmp.ne.s32.totalorder %s118, %s132
      %p134 = scmp.eq.s32.totalorder %s24, 0
      %p135 = por %p133, %p134
      %s137 = sadd.s32 %s136, 1
      %p140 = scmp.eq.s32.totalorder %s18, 1
      %p141 = scmp.ne.s32.totalorder %s136, %s138
      %p142 = scmp.eq.s32.totalorder %s18, 0
      %p143 = por %p141, %p142
      %p144 = scmp.ne.s32.totalorder %s136, %s138
      %p145 = scmp.eq.s32.totalorder %s23, 1
      %p146 = por %p144, %p145
      %p147 = scmp.ne.s32.totalorder %s138, %s139
      %p148 = scmp.eq.s32.totalorder %s23, 0
      %p149 = por %p147, %p148
      %p150 = scmp.ne.s32.totalorder %s138, %s139
      %p151 = scmp.eq.s32.totalorder %s24, 1
      %p152 = por %p150, %p151
      %p154 = scmp.ne.s32.totalorder %s139, %s153
      %p155 = scmp.eq.s32.totalorder %s24, 0
      %p156 = por %p154, %p155
      %s158 = sadd.s32 %s157, 1
      %p161 = scmp.eq.s32.totalorder %s18, 1
      %p162 = scmp.ne.s32.totalorder %s157, %s159
      %p163 = scmp.eq.s32.totalorder %s18, 0
      %p164 = por %p162, %p163
      %p165 = scmp.ne.s32.totalorder %s157, %s159
      %p166 = scmp.eq.s32.totalorder %s23, 1
      %p167 = por %p165, %p166
      %p168 = scmp.ne.s32.totalorder %s159, %s160
      %p169 = scmp.eq.s32.totalorder %s23, 0
      %p170 = por %p168, %p169
      %p171 = scmp.ne.s32.totalorder %s159, %s160
      %p172 = scmp.eq.s32.totalorder %s24, 1
      %p173 = por %p171, %p172
      %p175 = scmp.ne.s32.totalorder %s160, %s174
      %p176 = scmp.eq.s32.totalorder %s24, 0
      %p177 = por %p175, %p176
      %s178 = ssub.s32 %s18, %s25
      %p179 = scmp.eq.s32.totalorder %s178, 0
      %s181 = sadd.s32 %s180, 1
      %s182 = scalar_select %p179, %s180, %s181
      %p185 = pneg %p179
      %p186 = scmp.eq.s32.totalorder %s18, 1
      %p187 = por %p185, %p186
      %p188 = scmp.ne.s32.totalorder %s180, %s183
      %p189 = scmp.eq.s32.totalorder %s18, 0
      %p190 = por %p188, %p189
      %p191 = scmp.ne.s32.totalorder %s180, %s183
      %p192 = scmp.eq.s32.totalorder %s23, 1
      %p193 = por %p191, %p192
      %p194 = scmp.ne.s32.totalorder %s183, %s184
      %p195 = scmp.eq.s32.totalorder %s23, 0
      %p196 = por %p194, %p195
      %p197 = scmp.ne.s32.totalorder %s183, %s184
      %p198 = scmp.eq.s32.totalorder %s24, 1
      %p199 = por %p197, %p198
      %p201 = scmp.ne.s32.totalorder %s184, %s200
      %p202 = scmp.eq.s32.totalorder %s24, 0
      %p203 = por %p201, %p202
      %p204 = scmp.le.s32.totalorder 1, %s18
      %p205 = scmp.lt.s32.totalorder %s18, 3
      %p206 = pnand %p204, %p205
      %p207 = pneg %p206
      // Predicated region
      $region9: #{neural_network_forward.1} parent=5 // pred_check
        _
      $region10: #{neural_network_forward.1} parent=5 // pred_check_branch
        %209 = sbr.rel (%p206) target = $region12
      $region11: #{neural_network_forward.1} parent=5 // pred_region
        %s210 = ssub.s32 %s18, 1
        // Predicated region
        $region13: #{neural_network_forward.1} parent=11 // pred_check
          %p211 = pneg %p65
        $region14: #{neural_network_forward.1} parent=11 // pred_check_branch
          %213 = sbr.rel (%p211) target = $region16
        $region15: #{neural_network_forward.1} parent=11 // pred_region
          _
        $region16: #{neural_network_forward.1} parent=11 // pred_fallthru
          _
        // Predicated region
        $region17: #{neural_network_forward.1} parent=11 // pred_check
          %p214 = pneg %p86
        $region18: #{neural_network_forward.1} parent=11 // pred_check_branch
          %216 = sbr.rel (%p214) target = $region20
        $region19: #{neural_network_forward.1} parent=11 // pred_region
          _
        $region20: #{neural_network_forward.1} parent=11 // pred_fallthru
          _
        // Predicated region
        $region21: #{neural_network_forward.1} parent=11 // pred_check
          %p217 = pneg %p107
        $region22: #{neural_network_forward.1} parent=11 // pred_check_branch
          %219 = sbr.rel (%p217) target = $region24
        $region23: #{neural_network_forward.1} parent=11 // pred_region
          _
        $region24: #{neural_network_forward.1} parent=11 // pred_fallthru
          _
        // Predicated region
        $region25: #{neural_network_forward.1} parent=11 // pred_check
          %p220 = pneg %p128
        $region26: #{neural_network_forward.1} parent=11 // pred_check_branch
          %222 = sbr.rel (%p220) target = $region28
        $region27: #{neural_network_forward.1} parent=11 // pred_region
          _
        $region28: #{neural_network_forward.1} parent=11 // pred_fallthru
          _
        // Predicated region
        $region29: #{neural_network_forward.1} parent=11 // pred_check
          %p223 = pneg %p149
        $region30: #{neural_network_forward.1} parent=11 // pred_check_branch
          %225 = sbr.rel (%p223) target = $region32
        $region31: #{neural_network_forward.1} parent=11 // pred_region
          _
        $region32: #{neural_network_forward.1} parent=11 // pred_fallthru
          _
        // Predicated region
        $region33: #{neural_network_forward.1} parent=11 // pred_check
          %p226 = pneg %p170
        $region34: #{neural_network_forward.1} parent=11 // pred_check_branch
          %228 = sbr.rel (%p226) target = $region36
        $region35: #{neural_network_forward.1} parent=11 // pred_region
          _
        $region36: #{neural_network_forward.1} parent=11 // pred_fallthru
          _
      $region12: #{neural_network_forward.1} parent=5 // pred_fallthru
        _
      %p229 = scmp.lt.s32.totalorder %s18, 2
      // Predicated region
      $region37: #{neural_network_forward.1} parent=5 // pred_check
        %p230 = pneg %p229
      $region38: #{neural_network_forward.1} parent=5 // pred_check_branch
        %232 = sbr.rel (%p230) target = $region40
      $region39: #{neural_network_forward.1} parent=5 // pred_region
        // Predicated region
        $region41: #{neural_network_forward.1} parent=39 // pred_check
          %p233 = pneg %p38
        $region42: #{neural_network_forward.1} parent=39 // pred_check_branch
          %235 = sbr.rel (%p233) target = $region44
        $region43: #{neural_network_forward.1} parent=39 // pred_region
          %s236 = sand.u32 %s28, 1
          %s237 = sand.u32 %s28, 1
          %s238 = smul.addr %s237, 16
          %s239 = scalar_lea.vmem [#allocation3], %s238
          %s240 = smul.addr %s18, 8
          %s241 = scalar_lea.vmem %s0, %s240
          // Predicated region
          $region45: #{neural_network_forward.1} parent=43 // pred_check
            _
          $region46: #{neural_network_forward.1} parent=43 // pred_check_branch
            %243 = sbr.rel (0) target = $region48
          $region47: #{neural_network_forward.1} parent=43 // pred_region
            // Predicated region
            $region49: #{neural_network_forward.1} parent=47 // pred_check
              _
            $region50: #{neural_network_forward.1} parent=47 // pred_check_branch
              %245 = sbr.rel (0) target = $region52
            $region51: #{neural_network_forward.1} parent=47 // pred_region
              // Predicated region
              $region64: #{neural_network_forward.1} parent=51 // pred_check
                _
              $region65: #{neural_network_forward.1} parent=51 // pred_check_branch
                %263 = sbr.rel (0) target = $region67
              $region66: #{neural_network_forward.1} parent=51 // pred_region
                loop: start=0, step=1, limit=1
                $region68: #{neural_network_forward.1} parent=66 // loop_pre_header
                  _
                $region69: #{neural_network_forward.1} parent=66 // loop_header
                  %s265 = sphi 0, %s269
                  %p266 = scmp.ge.s32.totalorder %s265, 1
                  %s270 = sphi %s241, %s241
                  %s271 = sphi %s239, %s239
                $region70: #{neural_network_forward.1} parent=66 // loop_header_branch
                  %268 = sbr.rel (%p266) target = $region74
                $region71: #{neural_network_forward.1} parent=66 // loop_body
                  %v272 = vld [vmem:[%s270] sm:$0xff]
                  %273 = vst [vmem:[%s271] sm:$0xff] %v272
                  %v274 = vld [vmem:[%s270 + $0x10] sm:$0xff]
                  %275 = vst [vmem:[%s271 + $0x8] sm:$0xff] %v274
                $region72: #{neural_network_forward.1} parent=66 // loop_footer
                  %s269 = sadd.s32 1, %s265
                $region73: #{neural_network_forward.1} parent=66 // loop_footer_branch
                  %264 = sbr.rel target = $region69
                $region74: #{neural_network_forward.1} parent=66 // loop_exit
                  _
              $region67: #{neural_network_forward.1} parent=51 // pred_fallthru
                _
              // Predicated region
              $region75: #{neural_network_forward.1} parent=51 // pred_check
                _
              $region76: #{neural_network_forward.1} parent=51 // pred_check_branch
                %277 = sbr.rel target = $region78
              $region77: #{neural_network_forward.1} parent=51 // pred_region
                _
              $region78: #{neural_network_forward.1} parent=51 // pred_fallthru
                _
            $region52: #{neural_network_forward.1} parent=47 // pred_fallthru
              _
            // Predicated region
            $region53: #{neural_network_forward.1} parent=47 // pred_check
              _
            $region54: #{neural_network_forward.1} parent=47 // pred_check_branch
              %247 = sbr.rel target = $region56
            $region55: #{neural_network_forward.1} parent=47 // pred_region
              %s249 = ssub.s32 256, 1
              loop: start=0, step=1, limit=1
              $region57: #{neural_network_forward.1} parent=55 // loop_pre_header
                _
              $region58: #{neural_network_forward.1} parent=55 // loop_header
                %s251 = sphi 0, %s255
                %p252 = scmp.ge.s32.totalorder %s251, 1
                %s256 = sphi %s241, %s241
                %s257 = sphi %s239, %s239
              $region59: #{neural_network_forward.1} parent=55 // loop_header_branch
                %254 = sbr.rel (%p252) target = $region63
              $region60: #{neural_network_forward.1} parent=55 // loop_body
                %v258 = vld [vmem:[%s256] sm:%s249]
                %259 = vst [vmem:[%s257] sm:%s249] %v258
                %v260 = vld [vmem:[%s256 + $0x10] sm:%s249]
                %261 = vst [vmem:[%s257 + $0x8] sm:%s249] %v260
              $region61: #{neural_network_forward.1} parent=55 // loop_footer
                %s255 = sadd.s32 1, %s251
              $region62: #{neural_network_forward.1} parent=55 // loop_footer_branch
                %250 = sbr.rel target = $region58
              $region63: #{neural_network_forward.1} parent=55 // loop_exit
                _
            $region56: #{neural_network_forward.1} parent=47 // pred_fallthru
              _
          $region48: #{neural_network_forward.1} parent=43 // pred_fallthru
            _
          %278 = vnop
        $region44: #{neural_network_forward.1} parent=39 // pred_fallthru
          _
      $region40: #{neural_network_forward.1} parent=5 // pred_fallthru
        _
      %p279 = scmp.le.s32.totalorder 1, %s18
      %p280 = scmp.lt.s32.totalorder %s18, 3
      %p281 = pnand %p279, %p280
      %p282 = pneg %p281
      // Predicated region
      $region79: #{neural_network_forward.1} parent=5 // pred_check
        _
      $region80: #{neural_network_forward.1} parent=5 // pred_check_branch
        %284 = sbr.rel (%p281) target = $region82
      $region81: #{neural_network_forward.1} parent=5 // pred_region
        %s285 = ssub.s32 %s18, 1
        %s286 = sand.u32 %s31, 1
        %s287 = sand.u32 %s31, 1
        %s288 = smul.addr %s287, 16
        %s289 = scalar_lea.vmem [#allocation3], %s288
        // Predicated region
        $region83: #{neural_network_forward.1} parent=81 // pred_check
          %p290 = pneg %p44
        $region84: #{neural_network_forward.1} parent=81 // pred_check_branch
          %292 = sbr.rel (%p290) target = $region86
        $region85: #{neural_network_forward.1} parent=81 // pred_region
          _
        $region86: #{neural_network_forward.1} parent=81 // pred_fallthru
          _
        %s293 = sand.u32 %s31, 1
        %s294 = sand.u32 %s31, 1
        %s295 = smul.addr %s294, 16
        %s296 = scalar_lea.vmem [#allocation3], %s295
        %p297 = pneg %p44
        %p298 = pneg %p41
        %p299 = pneg %p65
        %p300 = pneg %p62
        %p301 = pneg %p86
        %p302 = pneg %p83
        %p303 = pneg %p107
        %p304 = pneg %p104
        %p305 = pneg %p128
        %p306 = pneg %p125
        %p307 = pneg %p149
        %p308 = pneg %p146
        %p309 = pneg %p170
        %p310 = pneg %p167
        %p311 = pneg %p196
        %p312 = pneg %p193
        %s313 = sand.u32 %s183, 1
        %s314 = scalar_lea.sflag [#allocation5], %s313
        %s315 = sand.u32 %s183, 1
        %s316 = scalar_lea.vmem [#allocation4], %s315
        %v317 = vld [vmem:[%s289] sm:$0xff]
        %v318 = vld [vmem:[%s289 + $0x8] sm:$0x7]
        %v319 = vld [vmem:[%s1] sm:$0xff]
        %v320 = vld [vmem:[%s1 + $0x8] sm:$0xff]
        %v321 = vld [vmem:[%s1 + $0x10] sm:$0xff]
        %v322 = vld [vmem:[%s1 + $0x18] sm:$0xff]
        %v323 = vld [vmem:[%s2] sm:$0xff]
        %v324 = vld [vmem:[%s2 + $0x8] sm:$0xff]
        %v325 = vld [vmem:[%s2 + $0x10] sm:$0xff]
        %v326 = vld [vmem:[%s2 + $0x18] sm:$0xff]
        %328 = vset.pattern.permute.xlu0 0
        %329 = vperm.xlu0 %328, %v323
        %v330 = vpop.permute.xlu0 %329
        %333 = vset.pattern.permute.xlu0 0
        %334 = vperm.xlu0 %333, %v324
        %v335 = vpop.permute.xlu0 %334
        %338 = vset.pattern.permute.xlu0 0
        %339 = vperm.xlu0 %338, %v325
        %v340 = vpop.permute.xlu0 %339
        %343 = vset.pattern.permute.xlu0 0
        %344 = vperm.xlu0 %343, %v326
        %v345 = vpop.permute.xlu0 %344
        %vm347 = vcmask 89088
        %v349 = vsel %vm347, %v319, 0
        %v352 = vsel %vm347, %v320, 0
        %v355 = vsel %vm347, %v321, 0
        %v358 = vsel %vm347, %v322, 0
        %vm360 = vcmask 1042432
        %v362 = vsel %vm360, %v318, 0
        %364 = vmatpush.msra.mxu0 0.0
        %365 = vmatpush.msra.mxu0 0.0
        %366 = vmatpush.msra.mxu0 0.0
        %367 = vmatpush.msra.mxu0 0.0
        %368 = vmatpush.msra.mxu0 0.0
        %369 = vmatpush.msra.mxu0 0.0
        %370 = vmatpush.msra.mxu0 0.0
        %371 = vmatpush.msra.mxu0 0.0
        %372 = vmatpush.msra.mxu0 0.0
        %373 = vmatpush.msra.mxu0 0.0
        %374 = vmatpush.msra.mxu0 0.0
        %375 = vmatpush.msra.mxu0 0.0
        %376 = vmatpush.msra.mxu0 0.0
        %377 = vmatpush.msra.mxu0 0.0
        %378 = vmatpush.msra.mxu0 %v362
        %379 = vmatpush.msra.mxu0 %v317
        %380 = vmatmul.f32.gmra.mxu0 %v349
        %v381 = vpop.f32.mrf.mxu0
        %v382 = vadd.f32 %v330, %v381
        %383 = vmatmul.f32.gmra.mxu0 %v352
        %v384 = vpop.f32.mrf.mxu0
        %v385 = vadd.f32 %v335, %v384
        %386 = vmatmul.f32.gmra.mxu0 %v355
        %v387 = vpop.f32.mrf.mxu0
        %v388 = vadd.f32 %v340, %v387
        %389 = vmatmul.f32.gmra.mxu0 %v358
        %v390 = vpop.f32.mrf.mxu0
        %v391 = vadd.f32 %v345, %v390
        %392 = vdwg.mxu0
        %v393 = vmax.f32 %v382, 0.0
        %v394 = vmax.f32 %v385, 0.0
        %v395 = vmax.f32 %v388, 0.0
        %v396 = vmax.f32 %v391, 0.0
        %v397 = vld [vmem:[%s3] sm:$0xff]
        %v398 = vld [vmem:[%s3 + $0x8] sm:$0xff]
        %v399 = vld [vmem:[%s4] sm:$0xff]
        %v400 = vld [vmem:[%s4 + $0x8] sm:$0xff]
        %402 = vset.pattern.permute.xlu0 0
        %403 = vperm.xlu0 %402, %v399
        %v404 = vpop.permute.xlu0 %403
        %407 = vset.pattern.permute.xlu0 0
        %408 = vperm.xlu0 %407, %v400
        %v409 = vpop.permute.xlu0 %408
        %vm411 = vcmask 261120
        %v413 = vsel %vm411, %v397, 0
        %v416 = vsel %vm411, %v398, 0
        %418 = vmatpush.msra.mxu0 0.0
        %419 = vmatpush.msra.mxu0 0.0
        %420 = vmatpush.msra.mxu0 0.0
        %421 = vmatpush.msra.mxu0 0.0
        %422 = vmatpush.msra.mxu0 0.0
        %423 = vmatpush.msra.mxu0 0.0
        %424 = vmatpush.msra.mxu0 0.0
        %425 = vmatpush.msra.mxu0 0.0
        %426 = vmatpush.msra.mxu0 0.0
        %427 = vmatpush.msra.mxu0 0.0
        %428 = vmatpush.msra.mxu0 0.0
        %429 = vmatpush.msra.mxu0 0.0
        %430 = vmatpush.msra.mxu0 %v396
        %431 = vmatpush.msra.mxu0 %v395
        %432 = vmatpush.msra.mxu0 %v394
        %433 = vmatpush.msra.mxu0 %v393
        %434 = vmatmul.f32.gmra.mxu0 %v413
        %v435 = vpop.f32.mrf.mxu0
        %v436 = vadd.f32 %v404, %v435
        %437 = vmatmul.f32.gmra.mxu0 %v416
        %v438 = vpop.f32.mrf.mxu0
        %v439 = vadd.f32 %v409, %v438
        %440 = vdwg.mxu0
        %v441 = vmax.f32 %v436, 0.0
        %v442 = vmax.f32 %v439, 0.0
        %v443 = vld [vmem:[%s5] sm:$0x1]
        %v444 = vld [vmem:[#allocation2] sm:$0x1]
        %446 = vset.pattern.permute.xlu0 0
        %447 = vperm.xlu0 %446, %v444
        %v448 = vpop.permute.xlu0 %447
        %v450 = vperm.slane %v448, 0
        %vm451 = vcmask 130048
        %v453 = vsel %vm451, %v443, 0
        %455 = vmatpush.msra.mxu0 0.0
        %456 = vmatpush.msra.mxu0 0.0
        %457 = vmatpush.msra.mxu0 0.0
        %458 = vmatpush.msra.mxu0 0.0
        %459 = vmatpush.msra.mxu0 0.0
        %460 = vmatpush.msra.mxu0 0.0
        %461 = vmatpush.msra.mxu0 0.0
        %462 = vmatpush.msra.mxu0 0.0
        %463 = vmatpush.msra.mxu0 0.0
        %464 = vmatpush.msra.mxu0 0.0
        %465 = vmatpush.msra.mxu0 0.0
        %466 = vmatpush.msra.mxu0 0.0
        %467 = vmatpush.msra.mxu0 0.0
        %468 = vmatpush.msra.mxu0 0.0
        %469 = vmatpush.msra.mxu0 %v442
        %470 = vmatpush.msra.mxu0 %v441
        %471 = vmatmul.f32.gmra.mxu0 %v453
        %v472 = vpop.f32.mrf.mxu0
        %v473 = vadd.f32 %v450, %v472
        %474 = vdwg.mxu0
        %v475 = vxor.u32 %v473, 2147483648
        %v476 = vmul.f32 %v475, 1.442695
        %v477 = vpow.pop %v476
        %v478 = vadd.f32 %v477, 1.0
        %v479 = vrcp.pop %v478
        %v480 = vmul.f32 %v478, %v479
        %v481 = vsub.f32 1.0, %v480
        %v482 = vmul.f32 %v479, %v481
        %v483 = vadd.f32 %v479, %v482
        %vm484 = vweird.f32 %v478
        %vm485 = vweird.f32 %v479
        %vm486 = vmor %vm484, %vm485
        %v487 = vsel %vm486, %v479, %v483
        %v488 = vand.u32 2147483647, %v478
        %vm489 = vcmp.eq.f32.partialorder %v488, 8.507059e+37
        %v490 = vand.u32 %v478, 2147483648
        %v491 = vor.u32 1.1754944e-38, %v490
        %v492 = vsel %vm489, %v491, %v487
        %v493 = vmul.f32 1.0, %v492
        %494 = vst [vmem:[%s316] sm:$0x1] %v493
        %s495 = sand.u32 %s183, 1
        %s496 = scalar_lea.sflag [#allocation5], %s495
        %s497 = sand.u32 %s183, 1
        %s498 = scalar_lea.vmem [#allocation4], %s497
        // Predicated region
        $region87: #{neural_network_forward.1} parent=81 // pred_check
          %p499 = pneg %p193
        $region88: #{neural_network_forward.1} parent=81 // pred_check_branch
          %501 = sbr.rel (%p499) target = $region90
        $region89: #{neural_network_forward.1} parent=81 // pred_region
          %503 = vsyncadd %s496, 0
          %s504 = scalar_lea.hbm %s7, %s23
          %s506 = sshll.u32 %s498, 4
          %s507 = int_to_ptr.vmem [resolvable:$true] %s506
          %s508 = sshll.u32 %s504, 4
          %s509 = int_to_ptr.hbm [resolvable:$true] %s508
          %511 = dma.vmem_to_hbm [thread:$0]  %s507, 16, %s509, %s496
        $region90: #{neural_network_forward.1} parent=81 // pred_fallthru
          _
      $region82: #{neural_network_forward.1} parent=5 // pred_fallthru
        _
      %p512 = scmp.le.s32.totalorder 2, %s18
      // Predicated region
      $region91: #{neural_network_forward.1} parent=5 // pred_check
        %p513 = pneg %p512
      $region92: #{neural_network_forward.1} parent=5 // pred_check_branch
        %515 = sbr.rel (%p513) target = $region94
      $region93: #{neural_network_forward.1} parent=5 // pred_region
        %s516 = ssub.s32 %s18, 2
        // Predicated region
        $region95: #{neural_network_forward.1} parent=93 // pred_check
          %p517 = pneg %p199
        $region96: #{neural_network_forward.1} parent=93 // pred_check_branch
          %519 = sbr.rel (%p517) target = $region98
        $region97: #{neural_network_forward.1} parent=93 // pred_region
          %s520 = sand.u32 %s184, 1
          %s521 = scalar_lea.sflag [#allocation5], %s520
          %s522 = sand.u32 %s184, 1
          %s523 = scalar_lea.vmem [#allocation4], %s522
          %525 = dma.done %s521, 16
        $region98: #{neural_network_forward.1} parent=93 // pred_fallthru
          _
      $region94: #{neural_network_forward.1} parent=5 // pred_fallthru
        _
    $region6: #{neural_network_forward.1} parent=1 // loop_footer
      %s22 = sadd.s32 1, %s18
    $region7: #{neural_network_forward.1} parent=1 // loop_footer_branch
      %17 = sbr.rel target = $region3
    $region8: #{neural_network_forward.1} parent=1 // loop_exit
      _
    %526 = vsyncpa [#allocation5], 1
    %s527 = scalar_lea.sflag [#allocation5], 1
    %528 = vsyncpa %s527, 1

</llo_original>
